<compile_context>
chip_gen: v5e
topology: v5e:2x2
jax: 0.10.0
libtpu: 0.0.40
codegen_flags: <defaults>
</compile_context>

<pallas_src>
from itertools import permutations

import numpy as np
import jax
import jax.numpy as jnp
from jax import lax
from jax.experimental import pallas as pl
from jax.experimental.pallas import tpu as pltpu


# ----------------------------------------------------------------------------
# Kernel A: nnet (linear) + fused epilogue:
#   - pre-window per-source overlap-head sums  (sx, used by the PIT loss)
#   - hann window multiply (commutes with the later source permutation)
#   - post-window per-source overlap-tail sums (sy, what the next chunk
#     correlates against)
# Tiled over rows (one row = one (batch, chunk) pair), grid axis "parallel".
# ----------------------------------------------------------------------------
def _nnet_window_kernel(x_ref, w_ref, b_ref, win_ref, mh_ref, mt_ref,
                        y_ref, sx_ref, sy_ref):
    # bf16 MXU matmul, f32 accumulation.
    y = jnp.dot(x_ref[...], w_ref[...], preferred_element_type=jnp.float32)
    y = y + b_ref[...]
    # Overlap-head sums of the PRE-window output (per source), via a tiny
    # constant 0/1 mask matmul -> (tm, n_src).
    sx_ref[...] = jnp.dot(y, mh_ref[...], preferred_element_type=jnp.float32)
    # Hann window fused here (row-independent => commutes with reorder).
    yw = y * win_ref[...]
    # Overlap-tail sums of the POST-window output (per source).
    sy_ref[...] = jnp.dot(yw, mt_ref[...], preferred_element_type=jnp.float32)
    y_ref[...] = yw


def nnet_window_sums(chunks, w, b, win_tiled, mhead, mtail, *, row_tile):
    m, k = chunks.shape
    _, n = w.shape
    n_src = mhead.shape[1]
    grid = (m // row_tile,)
    return pl.pallas_call(
        _nnet_window_kernel,
        out_shape=(
            jax.ShapeDtypeStruct((m, n), jnp.float32),
            jax.ShapeDtypeStruct((m, n_src), jnp.float32),
            jax.ShapeDtypeStruct((m, n_src), jnp.float32),
        ),
        grid_spec=pltpu.PrefetchScalarGridSpec(
            num_scalar_prefetch=0,
            grid=grid,
            in_specs=[
                pl.BlockSpec((row_tile, k), lambda i: (i, 0)),
                pl.BlockSpec((k, n), lambda i: (0, 0)),        # weights resident
                pl.BlockSpec((1, n), lambda i: (0, 0)),        # bias resident
                pl.BlockSpec((1, n), lambda i: (0, 0)),        # window resident
                pl.BlockSpec((n, n_src), lambda i: (0, 0)),    # head mask
                pl.BlockSpec((n, n_src), lambda i: (0, 0)),    # tail mask
            ],
            out_specs=(
                pl.BlockSpec((row_tile, n), lambda i: (i, 0)),
                pl.BlockSpec((row_tile, n_src), lambda i: (i, 0)),
                pl.BlockSpec((row_tile, n_src), lambda i: (i, 0)),
            ),
        ),
        compiler_params=pltpu.CompilerParams(
            dimension_semantics=("parallel",)),   # megacore-shardable on v7x
        # TODO(synk): for very large windows, also tile K/N and raise
        # vmem_limit_bytes so the weight tile fits v7x's 64 MiB VMEM.
    )(chunks, w, b, win_tiled, mhead, mtail)


# ----------------------------------------------------------------------------
# Kernel B: fused permutation-apply + overlap-add (strided VPU accumulation).
# Grid iterates chunk TILES sequentially ("arbitrary"); the padded output is
# kept resident in VMEM as an accumulator and written back once at the end.
# Every store is a full W-wide (multiple-of-128 lanes) slab at a hop-aligned
# dynamic offset -> lane-dense, no fold matrix, no MXU.
# ----------------------------------------------------------------------------
def _make_permute_ola_kernel(n_src, batch, chunk_tile, window_size, hop_size):
    w, hop = window_size, hop_size

    def kernel(y_ref, s_ref, o_ref):
        ct = pl.program_id(0)

        @pl.when(ct == 0)
        def _():
            o_ref[...] = jnp.zeros_like(o_ref)

        base = ct * (chunk_tile * hop)
        for c in range(chunk_tile):                 # static unroll over the tile
            sel = s_ref[c]                          # (n_src, n_src) one-hot rows
            rows = []                               # (zero rows for pad chunks)
            for i in range(n_src):
                row = sel[i, 0] * y_ref[:, c, 0:w]
                for j in range(1, n_src):
                    row = row + sel[i, j] * y_ref[:, c, j * w:(j + 1) * w]
                rows.append(row)                    # (batch, W)
            # TODO(synk): for n_src > 3, replace the select-matrix mix with a
            # scalar-prefetched permutation + dynamic-slice gather of sources.
            seg = jnp.concatenate(rows, axis=0)     # (n_src*batch, W), src-major
            t0 = pl.multiple_of(base + c * hop, hop)
            o_ref[:, pl.ds(t0, w)] += seg           # lane-dense OLA accumulate

    return kernel


def permute_ola(y_win3, sel, *, n_src, window_size, hop_size, chunk_tile):
    batch, n_chunks_pad, n = y_win3.shape
    n_pad_len = (n_chunks_pad - 1) * hop_size + window_size
    bs = n_src * batch
    kernel = _make_permute_ola_kernel(n_src, batch, chunk_tile,
                                      window_size, hop_size)
    return pl.pallas_call(
        kernel,
        out_shape=jax.ShapeDtypeStruct((bs, n_pad_len), jnp.float32),
        grid_spec=pltpu.PrefetchScalarGridSpec(
            num_scalar_prefetch=0,
            grid=(n_chunks_pad // chunk_tile,),
            in_specs=[
                pl.BlockSpec((batch, chunk_tile, n), lambda ct: (0, ct, 0)),
                pl.BlockSpec((chunk_tile, n_src, n_src), lambda ct: (ct, 0, 0)),
            ],
            out_specs=pl.BlockSpec((bs, n_pad_len), lambda ct: (0, 0)),
        ),
        compiler_params=pltpu.CompilerParams(
            dimension_semantics=("arbitrary",)),    # sequential accumulation
        # TODO(synk): for minutes-long audio, additionally tile the output time
        # axis (output would no longer fit VMEM as a single resident block).
    )(y_win3, sel)


# ----------------------------------------------------------------------------
# LambdaOverlapAdd.forward  (glue in plain JAX, compute in Pallas kernels)
# ----------------------------------------------------------------------------
def lambda_overlap_add(x, w_nn, b_nn, n_src, window_size, hop_size):
    batch, channels, n_frames = x.shape
    w, hop = window_size, hop_size
    ov = w - hop
    n_chunks = (n_frames + w) // hop + 1            # torch unfold, padding=W

    chunk_tile = 16                                 # chunks per OLA grid step
    n_chunks_pad = ((n_chunks + chunk_tile - 1) // chunk_tile) * chunk_tile
    m = batch * n_chunks_pad
    row_tile = 16 if m <= 256 else 256              # realistic sizes: 256+
    while m % row_tile:
        row_tile //= 2

    # ---- segmentation / unfold (pure indexing -> glue) ----
    pad_len = max(n_frames + 2 * w, (n_chunks_pad - 1) * hop + w)
    padded = jnp.pad(x, ((0, 0), (0, 0), (w, pad_len - n_frames - w)))
    idx = np.arange(n_chunks_pad)[:, None] * hop + np.arange(w)[None, :]
    chunks = padded[:, :, idx]                      # (B, C, n_chunks_pad, W)
    chunks = jnp.transpose(chunks, (0, 2, 1, 3))    # free for C == 1
    chunks = chunks.reshape(m, channels * w)
    # TODO(synk): for C > 1 / very long inputs, fold the unfold gather into the
    # nnet kernel's index_map via scalar prefetch instead of materializing it.

    # ---- constants for the fused nnet epilogue ----
    hann = (0.5 - 0.5 * np.cos(2.0 * np.pi * np.arange(w) / w)).astype(np.float32)
    win_tiled = jnp.asarray(np.tile(hann, n_src)).reshape(1, n_src * w)
    mhead = np.zeros((n_src * w, n_src), np.float32)
    mtail = np.zeros((n_src * w, n_src), np.float32)
    for s in range(n_src):
        mhead[s * w:s * w + ov, s] = 1.0            # first `ov` samples of src s
        mtail[s * w + hop:(s + 1) * w, s] = 1.0     # last  `ov` samples of src s

    # ---- nnet + window + overlap sums on all chunks (Pallas, parallel) ----
    y_win, sx, sy = nnet_window_sums(
        chunks.astype(jnp.bfloat16), w_nn.astype(jnp.bfloat16),
        b_nn.reshape(1, -1).astype(jnp.float32), win_tiled,
        jnp.asarray(mhead), jnp.asarray(mtail), row_tile=row_tile)

    # ---- permutation decision: tiny scalar scan over chunks (glue) ----
    sx3 = jnp.transpose(sx.reshape(batch, n_chunks_pad, n_src)[:, :n_chunks],
                        (1, 0, 2))                  # (n_chunks, B, n_src)
    sy3 = jnp.transpose(sy.reshape(batch, n_chunks_pad, n_src)[:, :n_chunks],
                        (1, 0, 2))
    perms = jnp.asarray(list(permutations(range(n_src))), dtype=jnp.int32)
    col = jnp.arange(n_src)

    def step(prev_perm, xs):
        sx_k, sy_prev = xs
        sy_p = jnp.take(sy_prev, prev_perm, axis=1)   # tail sums of prev OUTPUT
        pw = jnp.einsum("bi,bj->ij", sx_k, sy_p)      # pairwise "losses"
        losses = jnp.sum(pw[perms, col[None, :]], axis=1)
        new_perm = perms[jnp.argmin(losses)]          # first minimum wins
        return new_perm, new_perm

    init = jnp.arange(n_src, dtype=jnp.int32)
    _, perm_rest = lax.scan(step, init, (sx3[1:], sy3[:-1]))
    perm_all = jnp.concatenate([init[None, :], perm_rest], axis=0)
    sel = jax.nn.one_hot(perm_all, n_src, dtype=jnp.float32)
    sel = jnp.pad(sel, ((0, n_chunks_pad - n_chunks), (0, 0), (0, 0)))

    # ---- permutation apply + overlap-add (Pallas, strided accumulation) ----
    y_win3 = y_win.reshape(batch, n_chunks_pad, n_src * w)   # pure reshape
    out_pad = permute_ola(y_win3, sel, n_src=n_src, window_size=w,
                          hop_size=hop, chunk_tile=chunk_tile)
    out = out_pad[:, w:w + n_frames]                 # drop the unfold padding
    out = out.reshape(n_src, batch, n_frames)
    return jnp.transpose(out, (1, 0, 2))             # (batch, n_src, time)


# ----------------------------------------------------------------------------
# Pure numpy reference (same semantics as the PyTorch module)
# ----------------------------------------------------------------------------
def reference_numpy(x, w_nn, b_nn, n_src, w, hop):
    batch, channels, n_frames = x.shape
    n_chunks = (n_frames + w) // hop + 1
    padded = np.pad(x, ((0, 0), (0, 0), (w, w)))
    win = (0.5 - 0.5 * np.cos(2.0 * np.pi * np.arange(w) / w)).astype(np.float32)
    perms_l = list(permutations(range(n_src)))
    overlap_f = w - hop
    prev = None
    chunks_out = []
    for k in range(n_chunks):
        chunk = padded[:, :, k * hop:k * hop + w].reshape(batch, channels * w)
        tmp = (chunk @ w_nn + b_nn).reshape(batch, n_src, w)
        if k != 0:
            sx = tmp[..., :overlap_f].sum(-1)
            sy = prev[..., w - overlap_f:].sum(-1)
            pw = np.einsum("bi,bj->ij", sx, sy)
            best_p, best_val = 0, None
            for p, pe in enumerate(perms_l):
                val = sum(pw[pe[i], i] for i in range(n_src))
                if best_val is None or val < best_val:
                    best_val, best_p = val, p
            pe = perms_l[best_p]
            tmp = np.stack([tmp[:, pe[i], :] for i in range(n_src)], axis=1)
        tmp = tmp * win[None, None, :]
        prev = tmp
        chunks_out.append(tmp)
    out = np.zeros((batch, n_src, n_frames + 2 * w), np.float32)
    for k in range(n_chunks):
        out[:, :, k * hop:k * hop + w] += chunks_out[k]
    return out[:, :, w:w + n_frames]


if __name__ == "__main__":
    batch, channels, time_len = 2, 1, 2048
    n_src, window_size = 2, 256
    hop_size = window_size // 2

    key = jax.random.PRNGKey(0)
    kx, kw, kb = jax.random.split(key, 3)
    x = jax.random.normal(kx, (batch, channels, time_len), jnp.float32)
    w_nn = jax.random.normal(
        kw, (channels * window_size, n_src * window_size), jnp.float32
    ) / np.sqrt(channels * window_size)
    b_nn = jax.random.normal(kb, (n_src * window_size,), jnp.float32) * 0.01

    out = lambda_overlap_add(x, w_nn, b_nn, n_src, window_size, hop_size)
    out = jax.block_until_ready(out)

    # Reference uses the same bf16-rounded nnet inputs (bf16 is the MXU dtype).
    x_r = np.asarray(x.astype(jnp.bfloat16).astype(jnp.float32))
    w_r = np.asarray(w_nn.astype(jnp.bfloat16).astype(jnp.float32))
    ref = reference_numpy(x_r, w_r, np.asarray(b_nn), n_src, window_size, hop_size)

    assert out.shape == (batch, n_src, time_len)
    np.testing.assert_allclose(np.asarray(out), ref, rtol=2e-2, atol=2e-2)
    print("KERNEL_OK")
</pallas_src>

<mosaic_0001>
module attributes {stable_mosaic.version = 11 : i64} {
  func.func @_nnet_window_kernel(%arg0: i32, %arg1: memref<16x256xbf16, #tpu.memory_space<vmem>>, %arg2: memref<256x512xbf16, #tpu.memory_space<vmem>>, %arg3: memref<1x512xf32, #tpu.memory_space<vmem>>, %arg4: memref<1x512xf32, #tpu.memory_space<vmem>>, %arg5: memref<512x2xf32, #tpu.memory_space<vmem>>, %arg6: memref<512x2xf32, #tpu.memory_space<vmem>>, %arg7: memref<16x512xf32, #tpu.memory_space<vmem>>, %arg8: memref<16x2xf32, #tpu.memory_space<vmem>>, %arg9: memref<16x2xf32, #tpu.memory_space<vmem>>) attributes {dimension_semantics = [#tpu.dimension_semantics<parallel>], iteration_bounds = array<i64: 4>, scalar_prefetch = 0 : i64, scratch_operands = 0 : i64, tpu.core_type = #tpu.core_type<tc>, window_params = [{transform_indices = @transform_0, window_bounds = array<i64: 16, 256>}, {pipeline_mode = #tpu.pipeline_mode<synchronous>, transform_indices = @transform_1, window_bounds = array<i64: 256, 512>}, {pipeline_mode = #tpu.pipeline_mode<synchronous>, transform_indices = @transform_2, window_bounds = array<i64: 1, 512>}, {pipeline_mode = #tpu.pipeline_mode<synchronous>, transform_indices = @transform_3, window_bounds = array<i64: 1, 512>}, {pipeline_mode = #tpu.pipeline_mode<synchronous>, transform_indices = @transform_4, window_bounds = array<i64: 512, 2>}, {pipeline_mode = #tpu.pipeline_mode<synchronous>, transform_indices = @transform_5, window_bounds = array<i64: 512, 2>}, {transform_indices = @transform_6, window_bounds = array<i64: 16, 512>}, {transform_indices = @transform_7, window_bounds = array<i64: 16, 2>}, {transform_indices = @transform_8, window_bounds = array<i64: 16, 2>}]} {
    %c0 = arith.constant 0 : index
    %c0_0 = arith.constant 0 : index
    %0 = vector.load %arg1[%c0, %c0_0] : memref<16x256xbf16, #tpu.memory_space<vmem>>, vector<16x256xbf16>
    %c0_1 = arith.constant 0 : index
    %c0_2 = arith.constant 0 : index
    %1 = vector.load %arg2[%c0_1, %c0_2] : memref<256x512xbf16, #tpu.memory_space<vmem>>, vector<256x512xbf16>
    %cst = arith.constant dense<0.000000e+00> : vector<16x512xf32>
    %2 = tpu.matmul %0, %1, %cst {dimension_numbers = #tpu.dot_dimension_numbers<[1], [0], [0], [1], [0, 0, 1, 1], [], []>} : vector<16x256xbf16>, vector<256x512xbf16>, vector<16x512xf32> -> vector<16x512xf32>
    %c0_3 = arith.constant 0 : index
    %c0_4 = arith.constant 0 : index
    %3 = vector.load %arg3[%c0_3, %c0_4] : memref<1x512xf32, #tpu.memory_space<vmem>>, vector<1x512xf32>
    %4 = vector.broadcast %3 : vector<1x512xf32> to vector<16x512xf32>
    %5 = arith.addf %2, %4 : vector<16x512xf32>
    %c0_5 = arith.constant 0 : index
    %c0_6 = arith.constant 0 : index
    %6 = vector.load %arg5[%c0_5, %c0_6] : memref<512x2xf32, #tpu.memory_space<vmem>>, vector<512x2xf32>
    %cst_7 = arith.constant dense<0.000000e+00> : vector<16x2xf32>
    %7 = tpu.matmul %5, %6, %cst_7 {dimension_numbers = #tpu.dot_dimension_numbers<[1], [0], [0], [1], [0, 0, 1, 1], [], []>} : vector<16x512xf32>, vector<512x2xf32>, vector<16x2xf32> -> vector<16x2xf32>
    %c0_8 = arith.constant 0 : index
    %c0_9 = arith.constant 0 : index
    %8 = vector.load %arg8[%c0_8, %c0_9] : memref<16x2xf32, #tpu.memory_space<vmem>>, vector<16x2xf32>
    tpu.vector_store %arg8[%c0_8, %c0_9], %7 {strides = array<i32>} : memref<16x2xf32, #tpu.memory_space<vmem>>, vector<16x2xf32>,
    %c0_10 = arith.constant 0 : index
    %c0_11 = arith.constant 0 : index
    %9 = vector.load %arg4[%c0_10, %c0_11] : memref<1x512xf32, #tpu.memory_space<vmem>>, vector<1x512xf32>
    %10 = vector.broadcast %9 : vector<1x512xf32> to vector<16x512xf32>
    %11 = arith.mulf %5, %10 : vector<16x512xf32>
    %c0_12 = arith.constant 0 : index
    %c0_13 = arith.constant 0 : index
    %12 = vector.load %arg6[%c0_12, %c0_13] : memref<512x2xf32, #tpu.memory_space<vmem>>, vector<512x2xf32>
    %cst_14 = arith.constant dense<0.000000e+00> : vector<16x2xf32>
    %13 = tpu.matmul %11, %12, %cst_14 {dimension_numbers = #tpu.dot_dimension_numbers<[1], [0], [0], [1], [0, 0, 1, 1], [], []>} : vector<16x512xf32>, vector<512x2xf32>, vector<16x2xf32> -> vector<16x2xf32>
    %c0_15 = arith.constant 0 : index
    %c0_16 = arith.constant 0 : index
    %14 = vector.load %arg9[%c0_15, %c0_16] : memref<16x2xf32, #tpu.memory_space<vmem>>, vector<16x2xf32>
    tpu.vector_store %arg9[%c0_15, %c0_16], %13 {strides = array<i32>} : memref<16x2xf32, #tpu.memory_space<vmem>>, vector<16x2xf32>,
    %c0_17 = arith.constant 0 : index
    %c0_18 = arith.constant 0 : index
    %15 = vector.load %arg7[%c0_17, %c0_18] : memref<16x512xf32, #tpu.memory_space<vmem>>, vector<16x512xf32>
    tpu.vector_store %arg7[%c0_17, %c0_18], %11 {strides = array<i32>} : memref<16x512xf32, #tpu.memory_space<vmem>>, vector<16x512xf32>,
    return
  }
  func.func @transform_0(%arg0: i32) -> (i32, i32) {
    %c0_i32 = arith.constant 0 : i32
    %c0_i32_0 = arith.constant 0 : i32
    return %arg0, %c0_i32 : i32, i32
  }
  func.func @transform_1(%arg0: i32) -> (i32, i32) {
    %c0_i32 = arith.constant 0 : i32
    %c0_i32_0 = arith.constant 0 : i32
    %c0_i32_1 = arith.constant 0 : i32
    return %c0_i32, %c0_i32_0 : i32, i32
  }
  func.func @transform_2(%arg0: i32) -> (i32, i32) {
    %c0_i32 = arith.constant 0 : i32
    %c0_i32_0 = arith.constant 0 : i32
    %c0_i32_1 = arith.constant 0 : i32
    return %c0_i32, %c0_i32_0 : i32, i32
  }
  func.func @transform_3(%arg0: i32) -> (i32, i32) {
    %c0_i32 = arith.constant 0 : i32
    %c0_i32_0 = arith.constant 0 : i32
    %c0_i32_1 = arith.constant 0 : i32
    return %c0_i32, %c0_i32_0 : i32, i32
  }
  func.func @transform_4(%arg0: i32) -> (i32, i32) {
    %c0_i32 = arith.constant 0 : i32
    %c0_i32_0 = arith.constant 0 : i32
    %c0_i32_1 = arith.constant 0 : i32
    return %c0_i32, %c0_i32_0 : i32, i32
  }
  func.func @transform_5(%arg0: i32) -> (i32, i32) {
    %c0_i32 = arith.constant 0 : i32
    %c0_i32_0 = arith.constant 0 : i32
    %c0_i32_1 = arith.constant 0 : i32
    return %c0_i32, %c0_i32_0 : i32, i32
  }
  func.func @transform_6(%arg0: i32) -> (i32, i32) {
    %c0_i32 = arith.constant 0 : i32
    %c0_i32_0 = arith.constant 0 : i32
    return %arg0, %c0_i32 : i32, i32
  }
  func.func @transform_7(%arg0: i32) -> (i32, i32) {
    %c0_i32 = arith.constant 0 : i32
    %c0_i32_0 = arith.constant 0 : i32
    return %arg0, %c0_i32 : i32, i32
  }
  func.func @transform_8(%arg0: i32) -> (i32, i32) {
    %c0_i32 = arith.constant 0 : i32
    %c0_i32_0 = arith.constant 0 : i32
    return %arg0, %c0_i32 : i32, i32
  }
}

</mosaic_0001>

<llo_original>
// kernel: tpu_custom_call.1
$region0: #{tpu_custom_call.1}
  #allocation0 [shape = 'u32[]', space=smem, size = 0x4, offset = 0x4, fixed_abs, tag = 'smem constant byte address 0x4 - core index']
  #allocation1 [shape = 'u32[72,128]{1,0:T(1,128)}', space=vmem, size = 0x9000, scoped, tag = 'internal scratch']
  %s0 = inlined_call_operand.vmem [shape: bf16[64,256], index: 0, kind: input, shape index: {}]
  %s1 = inlined_call_operand.vmem [shape: bf16[256,512], index: 1, kind: input, shape index: {}]
  %s2 = inlined_call_operand.vmem [shape: f32[1,512], index: 2, kind: input, shape index: {}]
  %s3 = inlined_call_operand.vmem [shape: f32[1,512], index: 3, kind: input, shape index: {}]
  %s4 = inlined_call_operand.vmem [shape: f32[512,2], index: 4, kind: input, shape index: {}]
  %s5 = inlined_call_operand.vmem [shape: f32[512,2], index: 5, kind: input, shape index: {}]
  %s6 = inlined_call_operand.hbm [shape: f32[64,512], index: 6, kind: output, shape index: {0}]
  %s7 = inlined_call_operand.vmem [shape: f32[64,2], index: 7, kind: output, shape index: {1}]
  %s8 = inlined_call_operand.vmem [shape: f32[64,2], index: 8, kind: output, shape index: {2}]
  %9 = xla_tuple %s6, %s7, %s8
  %s10 = sld [smem:[#allocation0]]
  $region73: #{tpu_custom_call.1} parent=0
    _
  %s12 = ssub.s32 1, %s10
  %s13 = scalar_select 0, %s12, %s10
  $region1: #{tpu_custom_call.1} parent=0
    #allocation2 [shape = 'u8[65536]{0}', space=vmem, size = 0x10000, scoped, tag = 'output window, operand 0']
    #allocation3 [shape = 's32[2]{0}', space=sflag, size = 0x8, scoped, tag = 'scoped memory for tpu_custom_call.1']
    %14 = vsyncpa [#allocation3], 0
    %s15 = scalar_lea.sflag [#allocation3], 1
    %16 = vsyncpa %s15, 0
    loop: start=0, step=1, limit=6
    $region2: #{tpu_custom_call.1} parent=1 // loop_pre_header
      _
    $region3: #{tpu_custom_call.1} parent=1 // loop_header
      %s18 = sphi 0, %s22
      %p19 = scmp.ge.s32.totalorder %s18, 6
      %s28 = sphi 0, %s30
      %s31 = sphi 0, %s28
      %s32 = sphi 0, %s31
      %s48 = sphi 0, %s32
      %s52 = sphi 0, %s52
      %s54 = sphi 0, %s52
      %s55 = sphi 0, %s54
      %s69 = sphi 0, %s55
      %s73 = sphi 0, %s73
      %s75 = sphi 0, %s73
      %s76 = sphi 0, %s75
      %s90 = sphi 0, %s76
      %s94 = sphi 0, %s94
      %s96 = sphi 0, %s94
      %s97 = sphi 0, %s96
      %s111 = sphi 0, %s97
      %s115 = sphi 0, %s115
      %s117 = sphi 0, %s115
      %s118 = sphi 0, %s117
      %s132 = sphi 0, %s118
      %s136 = sphi 0, %s136
      %s138 = sphi 0, %s136
      %s139 = sphi 0, %s138
      %s153 = sphi 0, %s139
      %s159 = sphi 0, %s161
      %s162 = sphi 0, %s159
      %s163 = sphi 0, %s162
      %s179 = sphi 0, %s163
      %s185 = sphi 0, %s187
      %s188 = sphi 0, %s185
      %s189 = sphi 0, %s188
      %s205 = sphi 0, %s189
      %s211 = sphi 0, %s213
      %s214 = sphi 0, %s211
      %s215 = sphi 0, %s214
      %s231 = sphi 0, %s215
    $region4: #{tpu_custom_call.1} parent=1 // loop_header_branch
      %21 = sbr.rel (%p19) target = $region8
    $region5: #{tpu_custom_call.1} parent=1 // loop_body
      %s23 = ssub.s32 %s18, 1
      %s24 = ssub.s32 %s18, 2
      %s25 = sadd.s32 %s18, 1
      %s26 = ssub.s32 %s18, %s25
      %p27 = scmp.eq.s32.totalorder %s26, 0
      %s29 = sadd.s32 %s28, 1
      %s30 = scalar_select %p27, %s28, %s29
      %p33 = pneg %p27
      %p34 = scmp.eq.s32.totalorder %s18, 3
      %p35 = por %p33, %p34
      %p36 = scmp.ne.s32.totalorder %s28, %s31
      %p37 = scmp.eq.s32.totalorder %s18, 0
      %p38 = por %p36, %p37
      %p39 = scmp.ne.s32.totalorder %s28, %s31
      %p40 = scmp.eq.s32.totalorder %s23, 3
      %p41 = por %p39, %p40
      %p42 = scmp.ne.s32.totalorder %s31, %s32
      %p43 = scmp.eq.s32.totalorder %s23, 0
      %p44 = por %p42, %p43
      %p45 = scmp.ne.s32.totalorder %s31, %s32
      %p46 = scmp.eq.s32.totalorder %s24, 3
      %p47 = por %p45, %p46
      %p49 = scmp.ne.s32.totalorder %s32, %s48
      %p50 = scmp.eq.s32.totalorder %s24, 0
      %p51 = por %p49, %p50
      %s53 = sadd.s32 %s52, 1
      %p56 = scmp.eq.s32.totalorder %s18, 3
      %p57 = scmp.ne.s32.totalorder %s52, %s54
      %p58 = scmp.eq.s32.totalorder %s18, 0
      %p59 = por %p57, %p58
      %p60 = scmp.ne.s32.totalorder %s52, %s54
      %p61 = scmp.eq.s32.totalorder %s23, 3
      %p62 = por %p60, %p61
      %p63 = scmp.ne.s32.totalorder %s54, %s55
      %p64 = scmp.eq.s32.totalorder %s23, 0
      %p65 = por %p63, %p64
      %p66 = scmp.ne.s32.totalorder %s54, %s55
      %p67 = scmp.eq.s32.totalorder %s24, 3
      %p68 = por %p66, %p67
      %p70 = scmp.ne.s32.totalorder %s55, %s69
      %p71 = scmp.eq.s32.totalorder %s24, 0
      %p72 = por %p70, %p71
      %s74 = sadd.s32 %s73, 1
      %p77 = scmp.eq.s32.totalorder %s18, 3
      %p78 = scmp.ne.s32.totalorder %s73, %s75
      %p79 = scmp.eq.s32.totalorder %s18, 0
      %p80 = por %p78, %p79
      %p81 = scmp.ne.s32.totalorder %s73, %s75
      %p82 = scmp.eq.s32.totalorder %s23, 3
      %p83 = por %p81, %p82
      %p84 = scmp.ne.s32.totalorder %s75, %s76
      %p85 = scmp.eq.s32.totalorder %s23, 0
      %p86 = por %p84, %p85
      %p87 = scmp.ne.s32.totalorder %s75, %s76
      %p88 = scmp.eq.s32.totalorder %s24, 3
      %p89 = por %p87, %p88
      %p91 = scmp.ne.s32.totalorder %s76, %s90
      %p92 = scmp.eq.s32.totalorder %s24, 0
      %p93 = por %p91, %p92
      %s95 = sadd.s32 %s94, 1
      %p98 = scmp.eq.s32.totalorder %s18, 3
      %p99 = scmp.ne.s32.totalorder %s94, %s96
      %p100 = scmp.eq.s32.totalorder %s18, 0
      %p101 = por %p99, %p100
      %p102 = scmp.ne.s32.totalorder %s94, %s96
      %p103 = scmp.eq.s32.totalorder %s23, 3
      %p104 = por %p102, %p103
      %p105 = scmp.ne.s32.totalorder %s96, %s97
      %p106 = scmp.eq.s32.totalorder %s23, 0
      %p107 = por %p105, %p106
      %p108 = scmp.ne.s32.totalorder %s96, %s97
      %p109 = scmp.eq.s32.totalorder %s24, 3
      %p110 = por %p108, %p109
      %p112 = scmp.ne.s32.totalorder %s97, %s111
      %p113 = scmp.eq.s32.totalorder %s24, 0
      %p114 = por %p112, %p113
      %s116 = sadd.s32 %s115, 1
      %p119 = scmp.eq.s32.totalorder %s18, 3
      %p120 = scmp.ne.s32.totalorder %s115, %s117
      %p121 = scmp.eq.s32.totalorder %s18, 0
      %p122 = por %p120, %p121
      %p123 = scmp.ne.s32.totalorder %s115, %s117
      %p124 = scmp.eq.s32.totalorder %s23, 3
      %p125 = por %p123, %p124
      %p126 = scmp.ne.s32.totalorder %s117, %s118
      %p127 = scmp.eq.s32.totalorder %s23, 0
      %p128 = por %p126, %p127
      %p129 = scmp.ne.s32.totalorder %s117, %s118
      %p130 = scmp.eq.s32.totalorder %s24, 3
      %p131 = por %p129, %p130
      %p133 = scmp.ne.s32.totalorder %s118, %s132
      %p134 = scmp.eq.s32.totalorder %s24, 0
      %p135 = por %p133, %p134
      %s137 = sadd.s32 %s136, 1
      %p140 = scmp.eq.s32.totalorder %s18, 3
      %p141 = scmp.ne.s32.totalorder %s136, %s138
      %p142 = scmp.eq.s32.totalorder %s18, 0
      %p143 = por %p141, %p142
      %p144 = scmp.ne.s32.totalorder %s136, %s138
      %p145 = scmp.eq.s32.totalorder %s23, 3
      %p146 = por %p144, %p145
      %p147 = scmp.ne.s32.totalorder %s138, %s139
      %p148 = scmp.eq.s32.totalorder %s23, 0
      %p149 = por %p147, %p148
      %p150 = scmp.ne.s32.totalorder %s138, %s139
      %p151 = scmp.eq.s32.totalorder %s24, 3
      %p152 = por %p150, %p151
      %p154 = scmp.ne.s32.totalorder %s139, %s153
      %p155 = scmp.eq.s32.totalorder %s24, 0
      %p156 = por %p154, %p155
      %s157 = ssub.s32 %s18, %s25
      %p158 = scmp.eq.s32.totalorder %s157, 0
      %s160 = sadd.s32 %s159, 1
      %s161 = scalar_select %p158, %s159, %s160
      %p164 = pneg %p158
      %p165 = scmp.eq.s32.totalorder %s18, 3
      %p166 = por %p164, %p165
      %p167 = scmp.ne.s32.totalorder %s159, %s162
      %p168 = scmp.eq.s32.totalorder %s18, 0
      %p169 = por %p167, %p168
      %p170 = scmp.ne.s32.totalorder %s159, %s162
      %p171 = scmp.eq.s32.totalorder %s23, 3
      %p172 = por %p170, %p171
      %p173 = scmp.ne.s32.totalorder %s162, %s163
      %p174 = scmp.eq.s32.totalorder %s23, 0
      %p175 = por %p173, %p174
      %p176 = scmp.ne.s32.totalorder %s162, %s163
      %p177 = scmp.eq.s32.totalorder %s24, 3
      %p178 = por %p176, %p177
      %p180 = scmp.ne.s32.totalorder %s163, %s179
      %p181 = scmp.eq.s32.totalorder %s24, 0
      %p182 = por %p180, %p181
      %s183 = ssub.s32 %s18, %s25
      %p184 = scmp.eq.s32.totalorder %s183, 0
      %s186 = sadd.s32 %s185, 1
      %s187 = scalar_select %p184, %s185, %s186
      %p190 = pneg %p184
      %p191 = scmp.eq.s32.totalorder %s18, 3
      %p192 = por %p190, %p191
      %p193 = scmp.ne.s32.totalorder %s185, %s188
      %p194 = scmp.eq.s32.totalorder %s18, 0
      %p195 = por %p193, %p194
      %p196 = scmp.ne.s32.totalorder %s185, %s188
      %p197 = scmp.eq.s32.totalorder %s23, 3
      %p198 = por %p196, %p197
      %p199 = scmp.ne.s32.totalorder %s188, %s189
      %p200 = scmp.eq.s32.totalorder %s23, 0
      %p201 = por %p199, %p200
      %p202 = scmp.ne.s32.totalorder %s188, %s189
      %p203 = scmp.eq.s32.totalorder %s24, 3
      %p204 = por %p202, %p203
      %p206 = scmp.ne.s32.totalorder %s189, %s205
      %p207 = scmp.eq.s32.totalorder %s24, 0
      %p208 = por %p206, %p207
      %s209 = ssub.s32 %s18, %s25
      %p210 = scmp.eq.s32.totalorder %s209, 0
      %s212 = sadd.s32 %s211, 1
      %s213 = scalar_select %p210, %s211, %s212
      %p216 = pneg %p210
      %p217 = scmp.eq.s32.totalorder %s18, 3
      %p218 = por %p216, %p217
      %p219 = scmp.ne.s32.totalorder %s211, %s214
      %p220 = scmp.eq.s32.totalorder %s18, 0
      %p221 = por %p219, %p220
      %p222 = scmp.ne.s32.totalorder %s211, %s214
      %p223 = scmp.eq.s32.totalorder %s23, 3
      %p224 = por %p222, %p223
      %p225 = scmp.ne.s32.totalorder %s214, %s215
      %p226 = scmp.eq.s32.totalorder %s23, 0
      %p227 = por %p225, %p226
      %p228 = scmp.ne.s32.totalorder %s214, %s215
      %p229 = scmp.eq.s32.totalorder %s24, 3
      %p230 = por %p228, %p229
      %p232 = scmp.ne.s32.totalorder %s215, %s231
      %p233 = scmp.eq.s32.totalorder %s24, 0
      %p234 = por %p232, %p233
      %p235 = scmp.le.s32.totalorder 1, %s18
      %p236 = scmp.lt.s32.totalorder %s18, 5
      %p237 = pnand %p235, %p236
      %p238 = pneg %p237
      // Predicated region
      $region9: #{tpu_custom_call.1} parent=5 // pred_check
        _
      $region10: #{tpu_custom_call.1} parent=5 // pred_check_branch
        %240 = sbr.rel (%p237) target = $region12
      $region11: #{tpu_custom_call.1} parent=5 // pred_region
        %s241 = ssub.s32 %s18, 1
        // Predicated region
        $region13: #{tpu_custom_call.1} parent=11 // pred_check
          %p242 = pneg %p65
        $region14: #{tpu_custom_call.1} parent=11 // pred_check_branch
          %244 = sbr.rel (%p242) target = $region16
        $region15: #{tpu_custom_call.1} parent=11 // pred_region
          _
        $region16: #{tpu_custom_call.1} parent=11 // pred_fallthru
          _
        // Predicated region
        $region17: #{tpu_custom_call.1} parent=11 // pred_check
          %p245 = pneg %p86
        $region18: #{tpu_custom_call.1} parent=11 // pred_check_branch
          %247 = sbr.rel (%p245) target = $region20
        $region19: #{tpu_custom_call.1} parent=11 // pred_region
          _
        $region20: #{tpu_custom_call.1} parent=11 // pred_fallthru
          _
        // Predicated region
        $region21: #{tpu_custom_call.1} parent=11 // pred_check
          %p248 = pneg %p107
        $region22: #{tpu_custom_call.1} parent=11 // pred_check_branch
          %250 = sbr.rel (%p248) target = $region24
        $region23: #{tpu_custom_call.1} parent=11 // pred_region
          _
        $region24: #{tpu_custom_call.1} parent=11 // pred_fallthru
          _
        // Predicated region
        $region25: #{tpu_custom_call.1} parent=11 // pred_check
          %p251 = pneg %p128
        $region26: #{tpu_custom_call.1} parent=11 // pred_check_branch
          %253 = sbr.rel (%p251) target = $region28
        $region27: #{tpu_custom_call.1} parent=11 // pred_region
          _
        $region28: #{tpu_custom_call.1} parent=11 // pred_fallthru
          _
        // Predicated region
        $region29: #{tpu_custom_call.1} parent=11 // pred_check
          %p254 = pneg %p149
        $region30: #{tpu_custom_call.1} parent=11 // pred_check_branch
          %256 = sbr.rel (%p254) target = $region32
        $region31: #{tpu_custom_call.1} parent=11 // pred_region
          _
        $region32: #{tpu_custom_call.1} parent=11 // pred_fallthru
          _
      $region12: #{tpu_custom_call.1} parent=5 // pred_fallthru
        _
      %p257 = scmp.lt.s32.totalorder %s18, 4
      // Predicated region
      $region33: #{tpu_custom_call.1} parent=5 // pred_check
        %p258 = pneg %p257
      $region34: #{tpu_custom_call.1} parent=5 // pred_check_branch
        %260 = sbr.rel (%p258) target = $region36
      $region35: #{tpu_custom_call.1} parent=5 // pred_region
        // Predicated region
        $region37: #{tpu_custom_call.1} parent=35 // pred_check
          %p261 = pneg %p38
        $region38: #{tpu_custom_call.1} parent=35 // pred_check_branch
          %263 = sbr.rel (%p261) target = $region40
        $region39: #{tpu_custom_call.1} parent=35 // pred_region
          %s264 = smul.u32 2, %s18
          %p265 = scmp.lt.s32.totalorder %s264, 7
          %s266 = scalar_select %p265, %s264, 7
          %s267 = smul.addr %s266, 2
          %s268 = smul.addr %s267, 4
          %s269 = scalar_lea.vmem %s0, %s268
          %s270 = smul.u32 2, %s18
        $region40: #{tpu_custom_call.1} parent=35 // pred_fallthru
          _
      $region36: #{tpu_custom_call.1} parent=5 // pred_fallthru
        _
      %p271 = scmp.le.s32.totalorder 1, %s18
      %p272 = scmp.lt.s32.totalorder %s18, 5
      %p273 = pnand %p271, %p272
      %p274 = pneg %p273
      // Predicated region
      $region41: #{tpu_custom_call.1} parent=5 // pred_check
        _
      $region42: #{tpu_custom_call.1} parent=5 // pred_check_branch
        %276 = sbr.rel (%p273) target = $region44
      $region43: #{tpu_custom_call.1} parent=5 // pred_region
        %s277 = ssub.s32 %s18, 1
        %s278 = smul.u32 2, %s23
        %p279 = scmp.lt.s32.totalorder %s278, 7
        %s280 = scalar_select %p279, %s278, 7
        %s281 = smul.addr %s280, 2
        %s282 = smul.addr %s281, 4
        %s283 = scalar_lea.vmem %s0, %s282
        %p284 = pneg %p44
        %p285 = pneg %p41
        %p286 = pneg %p65
        %p287 = pneg %p62
        %p288 = pneg %p86
        %p289 = pneg %p83
        %p290 = pneg %p107
        %p291 = pneg %p104
        %p292 = pneg %p128
        %p293 = pneg %p125
        %p294 = pneg %p149
        %p295 = pneg %p146
        %p296 = pneg %p175
        %p297 = pneg %p172
        %s298 = sand.u32 %s162, 1
        %s299 = scalar_lea.sflag [#allocation3], %s298
        %s300 = sand.u32 %s162, 1
        %s301 = smul.addr %s300, 64
        %s302 = scalar_lea.vmem [#allocation2], %s301
        %p303 = pneg %p201
        %p304 = pneg %p198
        %s305 = smul.u32 2, %s23
        %p306 = scmp.lt.s32.totalorder %s305, 7
        %s307 = scalar_select %p306, %s305, 7
        %s308 = smul.addr %s307, 8
        %s309 = scalar_lea.vmem %s7, %s308
        %p310 = pneg %p227
        %p311 = pneg %p224
        %s312 = smul.u32 2, %s23
        %p313 = scmp.lt.s32.totalorder %s312, 7
        %s314 = scalar_select %p313, %s312, 7
        %s315 = smul.addr %s314, 8
        %s316 = scalar_lea.vmem %s8, %s315
        %s317 = smul.u32 2, %s23
        %p318 = scmp.lt.s32.totalorder %s317, 7
        %s319 = scalar_select %p318, %s317, 7
        %s320 = smul.addr %s319, 2
        %s321 = smul.addr %s320, 4
        %s322 = scalar_lea.vmem %s0, %s321
        %s323 = smul.u32 2, %s23
        %s324 = smul.u32 2, %s23
        %s325 = smul.u32 2, %s23
        %p326 = scmp.lt.s32.totalorder %s325, 7
        %s327 = scalar_select %p326, %s325, 7
        %s328 = smul.addr %s327, 8
        %s329 = scalar_lea.vmem %s7, %s328
        %s330 = smul.u32 2, %s23
        %s331 = smul.u32 2, %s23
        %p332 = scmp.lt.s32.totalorder %s331, 7
        %s333 = scalar_select %p332, %s331, 7
        %s334 = smul.addr %s333, 8
        %s335 = scalar_lea.vmem %s8, %s334
        %s336 = smul.u32 2, %s23
        %v337 = vld [vmem:[%s322] sm:$0xff]
        %v338 = vld [vmem:[%s322 + $0x8] sm:$0xff]
        %v339 = vld [vmem:[%s1] sm:$0xff]
        %v340 = vld [vmem:[%s1 + $0x8] sm:$0xff]
        %v341 = vld [vmem:[%s1 + $0x10] sm:$0xff]
        %v342 = vld [vmem:[%s1 + $0x18] sm:$0xff]
        %v343 = vld [vmem:[%s1 + $0x20] sm:$0xff]
        %v344 = vld [vmem:[%s1 + $0x28] sm:$0xff]
        %v345 = vld [vmem:[%s1 + $0x30] sm:$0xff]
        %v346 = vld [vmem:[%s1 + $0x38] sm:$0xff]
        %v347 = vld [vmem:[%s1 + $0x40] sm:$0xff]
        %v348 = vld [vmem:[%s1 + $0x48] sm:$0xff]
        %v349 = vld [vmem:[%s1 + $0x50] sm:$0xff]
        %v350 = vld [vmem:[%s1 + $0x58] sm:$0xff]
        %v351 = vld [vmem:[%s1 + $0x60] sm:$0xff]
        %v352 = vld [vmem:[%s1 + $0x68] sm:$0xff]
        %v353 = vld [vmem:[%s1 + $0x70] sm:$0xff]
        %v354 = vld [vmem:[%s1 + $0x78] sm:$0xff]
        %v355 = vld [vmem:[%s1 + $0x80] sm:$0xff]
        %v356 = vld [vmem:[%s1 + $0x88] sm:$0xff]
        %v357 = vld [vmem:[%s1 + $0x90] sm:$0xff]
        %v358 = vld [vmem:[%s1 + $0x98] sm:$0xff]
        %v359 = vld [vmem:[%s1 + $0xa0] sm:$0xff]
        %v360 = vld [vmem:[%s1 + $0xa8] sm:$0xff]
        %v361 = vld [vmem:[%s1 + $0xb0] sm:$0xff]
        %v362 = vld [vmem:[%s1 + $0xb8] sm:$0xff]
        %v363 = vld [vmem:[%s1 + $0xc0] sm:$0xff]
        %v364 = vld [vmem:[%s1 + $0xc8] sm:$0xff]
        %v365 = vld [vmem:[%s1 + $0xd0] sm:$0xff]
        %v366 = vld [vmem:[%s1 + $0xd8] sm:$0xff]
        %v367 = vld [vmem:[%s1 + $0xe0] sm:$0xff]
        %v368 = vld [vmem:[%s1 + $0xe8] sm:$0xff]
        %v369 = vld [vmem:[%s1 + $0xf0] sm:$0xff]
        %v370 = vld [vmem:[%s1 + $0xf8] sm:$0xff]
        %v371 = vld [vmem:[%s1 + $0x100] sm:$0xff]
        %v372 = vld [vmem:[%s1 + $0x108] sm:$0xff]
        %v373 = vld [vmem:[%s1 + $0x110] sm:$0xff]
        %v374 = vld [vmem:[%s1 + $0x118] sm:$0xff]
        %v375 = vld [vmem:[%s1 + $0x120] sm:$0xff]
        %v376 = vld [vmem:[%s1 + $0x128] sm:$0xff]
        %v377 = vld [vmem:[%s1 + $0x130] sm:$0xff]
        %v378 = vld [vmem:[%s1 + $0x138] sm:$0xff]
        %v379 = vld [vmem:[%s1 + $0x140] sm:$0xff]
        %v380 = vld [vmem:[%s1 + $0x148] sm:$0xff]
        %v381 = vld [vmem:[%s1 + $0x150] sm:$0xff]
        %v382 = vld [vmem:[%s1 + $0x158] sm:$0xff]
        %v383 = vld [vmem:[%s1 + $0x160] sm:$0xff]
        %v384 = vld [vmem:[%s1 + $0x168] sm:$0xff]
        %v385 = vld [vmem:[%s1 + $0x170] sm:$0xff]
        %v386 = vld [vmem:[%s1 + $0x178] sm:$0xff]
        %v387 = vld [vmem:[%s1 + $0x180] sm:$0xff]
        %v388 = vld [vmem:[%s1 + $0x188] sm:$0xff]
        %v389 = vld [vmem:[%s1 + $0x190] sm:$0xff]
        %v390 = vld [vmem:[%s1 + $0x198] sm:$0xff]
        %v391 = vld [vmem:[%s1 + $0x1a0] sm:$0xff]
        %v392 = vld [vmem:[%s1 + $0x1a8] sm:$0xff]
        %v393 = vld [vmem:[%s1 + $0x1b0] sm:$0xff]
        %v394 = vld [vmem:[%s1 + $0x1b8] sm:$0xff]
        %v395 = vld [vmem:[%s1 + $0x1c0] sm:$0xff]
        %v396 = vld [vmem:[%s1 + $0x1c8] sm:$0xff]
        %v397 = vld [vmem:[%s1 + $0x1d0] sm:$0xff]
        %v398 = vld [vmem:[%s1 + $0x1d8] sm:$0xff]
        %v399 = vld [vmem:[%s1 + $0x1e0] sm:$0xff]
        %v400 = vld [vmem:[%s1 + $0x1e8] sm:$0xff]
        %v401 = vld [vmem:[%s1 + $0x1f0] sm:$0xff]
        %v402 = vld [vmem:[%s1 + $0x1f8] sm:$0xff]
        %v403 = vld [vmem:[%s2] sm:$0xf]
        %v405 = vperm.slane %v403, 0
        %v406 = vperm.slane %v403, 1
        %v407 = vperm.slane %v403, 2
        %v408 = vperm.slane %v403, 3
        %v415 = vunpack.c.l.b16 %v337
        %v416 = vunpack.c.h.b16 %v337
        %v417 = vunpack.c.l.b16 %v338
        %v418 = vunpack.c.h.b16 %v338
        %v419 = vpack.c.b16 %v417, %v415
        %v420 = vpack.c.b16 %v418, %v416
        %v487 = vunpack.c.l.b16 %v339
        %v488 = vunpack.c.h.b16 %v339
        %v489 = vunpack.c.l.b16 %v340
        %v490 = vunpack.c.h.b16 %v340
        %v491 = vunpack.c.l.b16 %v341
        %v492 = vunpack.c.h.b16 %v341
        %v493 = vunpack.c.l.b16 %v342
        %v494 = vunpack.c.h.b16 %v342
        %v495 = vunpack.c.l.b16 %v343
        %v496 = vunpack.c.h.b16 %v343
        %v497 = vunpack.c.l.b16 %v344
        %v498 = vunpack.c.h.b16 %v344
        %v499 = vunpack.c.l.b16 %v345
        %v500 = vunpack.c.h.b16 %v345
        %v501 = vunpack.c.l.b16 %v346
        %v502 = vunpack.c.h.b16 %v346
        %v503 = vunpack.c.l.b16 %v347
        %v504 = vunpack.c.h.b16 %v347
        %v505 = vunpack.c.l.b16 %v348
        %v506 = vunpack.c.h.b16 %v348
        %v507 = vunpack.c.l.b16 %v349
        %v508 = vunpack.c.h.b16 %v349
        %v509 = vunpack.c.l.b16 %v350
        %v510 = vunpack.c.h.b16 %v350
        %v511 = vunpack.c.l.b16 %v351
        %v512 = vunpack.c.h.b16 %v351
        %v513 = vunpack.c.l.b16 %v352
        %v514 = vunpack.c.h.b16 %v352
        %v515 = vunpack.c.l.b16 %v353
        %v516 = vunpack.c.h.b16 %v353
        %v517 = vunpack.c.l.b16 %v354
        %v518 = vunpack.c.h.b16 %v354
        %v519 = vunpack.c.l.b16 %v355
        %v520 = vunpack.c.h.b16 %v355
        %v521 = vunpack.c.l.b16 %v356
        %v522 = vunpack.c.h.b16 %v356
        %v523 = vunpack.c.l.b16 %v357
        %v524 = vunpack.c.h.b16 %v357
        %v525 = vunpack.c.l.b16 %v358
        %v526 = vunpack.c.h.b16 %v358
        %v527 = vunpack.c.l.b16 %v359
        %v528 = vunpack.c.h.b16 %v359
        %v529 = vunpack.c.l.b16 %v360
        %v530 = vunpack.c.h.b16 %v360
        %v531 = vunpack.c.l.b16 %v361
        %v532 = vunpack.c.h.b16 %v361
        %v533 = vunpack.c.l.b16 %v362
        %v534 = vunpack.c.h.b16 %v362
        %v535 = vunpack.c.l.b16 %v363
        %v536 = vunpack.c.h.b16 %v363
        %v537 = vunpack.c.l.b16 %v364
        %v538 = vunpack.c.h.b16 %v364
        %v539 = vunpack.c.l.b16 %v365
        %v540 = vunpack.c.h.b16 %v365
        %v541 = vunpack.c.l.b16 %v366
        %v542 = vunpack.c.h.b16 %v366
        %v543 = vunpack.c.l.b16 %v367
        %v544 = vunpack.c.h.b16 %v367
        %v545 = vunpack.c.l.b16 %v368
        %v546 = vunpack.c.h.b16 %v368
        %v547 = vunpack.c.l.b16 %v369
        %v548 = vunpack.c.h.b16 %v369
        %v549 = vunpack.c.l.b16 %v370
        %v550 = vunpack.c.h.b16 %v370
        %v551 = vunpack.c.l.b16 %v371
        %v552 = vunpack.c.h.b16 %v371
        %v553 = vunpack.c.l.b16 %v372
        %v554 = vunpack.c.h.b16 %v372
        %v555 = vunpack.c.l.b16 %v373
        %v556 = vunpack.c.h.b16 %v373
        %v557 = vunpack.c.l.b16 %v374
        %v558 = vunpack.c.h.b16 %v374
        %v559 = vunpack.c.l.b16 %v375
        %v560 = vunpack.c.h.b16 %v375
        %v561 = vunpack.c.l.b16 %v376
        %v562 = vunpack.c.h.b16 %v376
        %v563 = vunpack.c.l.b16 %v377
        %v564 = vunpack.c.h.b16 %v377
        %v565 = vunpack.c.l.b16 %v378
        %v566 = vunpack.c.h.b16 %v378
        %v567 = vunpack.c.l.b16 %v379
        %v568 = vunpack.c.h.b16 %v379
        %v569 = vunpack.c.l.b16 %v380
        %v570 = vunpack.c.h.b16 %v380
        %v571 = vunpack.c.l.b16 %v381
        %v572 = vunpack.c.h.b16 %v381
        %v573 = vunpack.c.l.b16 %v382
        %v574 = vunpack.c.h.b16 %v382
        %v575 = vunpack.c.l.b16 %v383
        %v576 = vunpack.c.h.b16 %v383
        %v577 = vunpack.c.l.b16 %v384
        %v578 = vunpack.c.h.b16 %v384
        %v579 = vunpack.c.l.b16 %v385
        %v580 = vunpack.c.h.b16 %v385
        %v581 = vunpack.c.l.b16 %v386
        %v582 = vunpack.c.h.b16 %v386
        %v583 = vunpack.c.l.b16 %v387
        %v584 = vunpack.c.h.b16 %v387
        %v585 = vunpack.c.l.b16 %v388
        %v586 = vunpack.c.h.b16 %v388
        %v587 = vunpack.c.l.b16 %v389
        %v588 = vunpack.c.h.b16 %v389
        %v589 = vunpack.c.l.b16 %v390
        %v590 = vunpack.c.h.b16 %v390
        %v591 = vunpack.c.l.b16 %v391
        %v592 = vunpack.c.h.b16 %v391
        %v593 = vunpack.c.l.b16 %v392
        %v594 = vunpack.c.h.b16 %v392
        %v595 = vunpack.c.l.b16 %v393
        %v596 = vunpack.c.h.b16 %v393
        %v597 = vunpack.c.l.b16 %v394
        %v598 = vunpack.c.h.b16 %v394
        %v599 = vunpack.c.l.b16 %v395
        %v600 = vunpack.c.h.b16 %v395
        %v601 = vunpack.c.l.b16 %v396
        %v602 = vunpack.c.h.b16 %v396
        %v603 = vunpack.c.l.b16 %v397
        %v604 = vunpack.c.h.b16 %v397
        %v605 = vunpack.c.l.b16 %v398
        %v606 = vunpack.c.h.b16 %v398
        %v607 = vunpack.c.l.b16 %v399
        %v608 = vunpack.c.h.b16 %v399
        %v609 = vunpack.c.l.b16 %v400
        %v610 = vunpack.c.h.b16 %v400
        %v611 = vunpack.c.l.b16 %v401
        %v612 = vunpack.c.h.b16 %v401
        %v613 = vunpack.c.l.b16 %v402
        %v614 = vunpack.c.h.b16 %v402
        %v615 = vpack.c.b16 %v491, %v487
        %v616 = vpack.c.b16 %v492, %v488
        %v617 = vpack.c.b16 %v493, %v489
        %v618 = vpack.c.b16 %v494, %v490
        %v619 = vpack.c.b16 %v499, %v495
        %v620 = vpack.c.b16 %v500, %v496
        %v621 = vpack.c.b16 %v501, %v497
        %v622 = vpack.c.b16 %v502, %v498
        %v623 = vpack.c.b16 %v507, %v503
        %v624 = vpack.c.b16 %v508, %v504
        %v625 = vpack.c.b16 %v509, %v505
        %v626 = vpack.c.b16 %v510, %v506
        %v627 = vpack.c.b16 %v515, %v511
        %v628 = vpack.c.b16 %v516, %v512
        %v629 = vpack.c.b16 %v517, %v513
        %v630 = vpack.c.b16 %v518, %v514
        %v631 = vpack.c.b16 %v523, %v519
        %v632 = vpack.c.b16 %v524, %v520
        %v633 = vpack.c.b16 %v525, %v521
        %v634 = vpack.c.b16 %v526, %v522
        %v635 = vpack.c.b16 %v531, %v527
        %v636 = vpack.c.b16 %v532, %v528
        %v637 = vpack.c.b16 %v533, %v529
        %v638 = vpack.c.b16 %v534, %v530
        %v639 = vpack.c.b16 %v539, %v535
        %v640 = vpack.c.b16 %v540, %v536
        %v641 = vpack.c.b16 %v541, %v537
        %v642 = vpack.c.b16 %v542, %v538
        %v643 = vpack.c.b16 %v547, %v543
        %v644 = vpack.c.b16 %v548, %v544
        %v645 = vpack.c.b16 %v549, %v545
        %v646 = vpack.c.b16 %v550, %v546
        %v647 = vpack.c.b16 %v555, %v551
        %v648 = vpack.c.b16 %v556, %v552
        %v649 = vpack.c.b16 %v557, %v553
        %v650 = vpack.c.b16 %v558, %v554
        %v651 = vpack.c.b16 %v563, %v559
        %v652 = vpack.c.b16 %v564, %v560
        %v653 = vpack.c.b16 %v565, %v561
        %v654 = vpack.c.b16 %v566, %v562
        %v655 = vpack.c.b16 %v571, %v567
        %v656 = vpack.c.b16 %v572, %v568
        %v657 = vpack.c.b16 %v573, %v569
        %v658 = vpack.c.b16 %v574, %v570
        %v659 = vpack.c.b16 %v579, %v575
        %v660 = vpack.c.b16 %v580, %v576
        %v661 = vpack.c.b16 %v581, %v577
        %v662 = vpack.c.b16 %v582, %v578
        %v663 = vpack.c.b16 %v587, %v583
        %v664 = vpack.c.b16 %v588, %v584
        %v665 = vpack.c.b16 %v589, %v585
        %v666 = vpack.c.b16 %v590, %v586
        %v667 = vpack.c.b16 %v595, %v591
        %v668 = vpack.c.b16 %v596, %v592
        %v669 = vpack.c.b16 %v597, %v593
        %v670 = vpack.c.b16 %v598, %v594
        %v671 = vpack.c.b16 %v603, %v599
        %v672 = vpack.c.b16 %v604, %v600
        %v673 = vpack.c.b16 %v605, %v601
        %v674 = vpack.c.b16 %v606, %v602
        %v675 = vpack.c.b16 %v611, %v607
        %v676 = vpack.c.b16 %v612, %v608
        %v677 = vpack.c.b16 %v613, %v609
        %v678 = vpack.c.b16 %v614, %v610
        %743 = vmatpush.bf16.msra.mxu0 %v643
        %744 = vmatpush.bf16.msra.mxu0 %v639
        %745 = vmatpush.bf16.msra.mxu0 %v635
        %746 = vmatpush.bf16.msra.mxu0 %v631
        %747 = vmatpush.bf16.msra.mxu0 %v627
        %748 = vmatpush.bf16.msra.mxu0 %v623
        %749 = vmatpush.bf16.msra.mxu0 %v619
        %750 = vmatpush.bf16.msra.mxu0 %v615
        %751 = vmatmul.bf16.gmra.mxu0 %v419
        %v752 = vpop.f32.mrf.mxu0
        %v753 = vadd.f32 %v405, %v752
        %v754 = vpop.f32.mrf.mxu0
        %v755 = vadd.f32 %v405, %v754
        %756 = vdwg.mxu0
        %757 = vmatpush.bf16.msra.mxu0 %v675
        %758 = vmatpush.bf16.msra.mxu0 %v671
        %759 = vmatpush.bf16.msra.mxu0 %v667
        %760 = vmatpush.bf16.msra.mxu0 %v663
        %761 = vmatpush.bf16.msra.mxu0 %v659
        %762 = vmatpush.bf16.msra.mxu0 %v655
        %763 = vmatpush.bf16.msra.mxu0 %v651
        %764 = vmatpush.bf16.msra.mxu0 %v647
        %765 = vmatmul.bf16.gmra.mxu0 %v420
        %v766 = vpop.f32.mrf.mxu0
        %v767 = vadd.f32 %v753, %v766
        %v768 = vpop.f32.mrf.mxu0
        %v769 = vadd.f32 %v755, %v768
        %770 = vdwg.mxu0
        %771 = vmatpush.bf16.msra.mxu0 %v644
        %772 = vmatpush.bf16.msra.mxu0 %v640
        %773 = vmatpush.bf16.msra.mxu0 %v636
        %774 = vmatpush.bf16.msra.mxu0 %v632
        %775 = vmatpush.bf16.msra.mxu0 %v628
        %776 = vmatpush.bf16.msra.mxu0 %v624
        %777 = vmatpush.bf16.msra.mxu0 %v620
        %778 = vmatpush.bf16.msra.mxu0 %v616
        %779 = vmatmul.bf16.gmra.mxu0 %v419
        %v780 = vpop.f32.mrf.mxu0
        %v781 = vadd.f32 %v406, %v780
        %v782 = vpop.f32.mrf.mxu0
        %v783 = vadd.f32 %v406, %v782
        %784 = vdwg.mxu0
        %785 = vmatpush.bf16.msra.mxu0 %v676
        %786 = vmatpush.bf16.msra.mxu0 %v672
        %787 = vmatpush.bf16.msra.mxu0 %v668
        %788 = vmatpush.bf16.msra.mxu0 %v664
        %789 = vmatpush.bf16.msra.mxu0 %v660
        %790 = vmatpush.bf16.msra.mxu0 %v656
        %791 = vmatpush.bf16.msra.mxu0 %v652
        %792 = vmatpush.bf16.msra.mxu0 %v648
        %793 = vmatmul.bf16.gmra.mxu0 %v420
        %v794 = vpop.f32.mrf.mxu0
        %v795 = vadd.f32 %v781, %v794
        %v796 = vpop.f32.mrf.mxu0
        %v797 = vadd.f32 %v783, %v796
        %798 = vdwg.mxu0
        %799 = vmatpush.bf16.msra.mxu0 %v645
        %800 = vmatpush.bf16.msra.mxu0 %v641
        %801 = vmatpush.bf16.msra.mxu0 %v637
        %802 = vmatpush.bf16.msra.mxu0 %v633
        %803 = vmatpush.bf16.msra.mxu0 %v629
        %804 = vmatpush.bf16.msra.mxu0 %v625
        %805 = vmatpush.bf16.msra.mxu0 %v621
        %806 = vmatpush.bf16.msra.mxu0 %v617
        %807 = vmatmul.bf16.gmra.mxu0 %v419
        %v808 = vpop.f32.mrf.mxu0
        %v809 = vadd.f32 %v407, %v808
        %v810 = vpop.f32.mrf.mxu0
        %v811 = vadd.f32 %v407, %v810
        %812 = vdwg.mxu0
        %813 = vmatpush.bf16.msra.mxu0 %v677
        %814 = vmatpush.bf16.msra.mxu0 %v673
        %815 = vmatpush.bf16.msra.mxu0 %v669
        %816 = vmatpush.bf16.msra.mxu0 %v665
        %817 = vmatpush.bf16.msra.mxu0 %v661
        %818 = vmatpush.bf16.msra.mxu0 %v657
        %819 = vmatpush.bf16.msra.mxu0 %v653
        %820 = vmatpush.bf16.msra.mxu0 %v649
        %821 = vmatmul.bf16.gmra.mxu0 %v420
        %v822 = vpop.f32.mrf.mxu0
        %v823 = vadd.f32 %v809, %v822
        %v824 = vpop.f32.mrf.mxu0
        %v825 = vadd.f32 %v811, %v824
        %826 = vdwg.mxu0
        %827 = vmatpush.bf16.msra.mxu0 %v646
        %828 = vmatpush.bf16.msra.mxu0 %v642
        %829 = vmatpush.bf16.msra.mxu0 %v638
        %830 = vmatpush.bf16.msra.mxu0 %v634
        %831 = vmatpush.bf16.msra.mxu0 %v630
        %832 = vmatpush.bf16.msra.mxu0 %v626
        %833 = vmatpush.bf16.msra.mxu0 %v622
        %834 = vmatpush.bf16.msra.mxu0 %v618
        %835 = vmatmul.bf16.gmra.mxu0 %v419
        %v836 = vpop.f32.mrf.mxu0
        %v837 = vadd.f32 %v408, %v836
        %v838 = vpop.f32.mrf.mxu0
        %v839 = vadd.f32 %v408, %v838
        %840 = vdwg.mxu0
        %841 = vmatpush.bf16.msra.mxu0 %v678
        %842 = vmatpush.bf16.msra.mxu0 %v674
        %843 = vmatpush.bf16.msra.mxu0 %v670
        %844 = vmatpush.bf16.msra.mxu0 %v666
        %845 = vmatpush.bf16.msra.mxu0 %v662
        %846 = vmatpush.bf16.msra.mxu0 %v658
        %847 = vmatpush.bf16.msra.mxu0 %v654
        %848 = vmatpush.bf16.msra.mxu0 %v650
        %849 = vmatmul.bf16.gmra.mxu0 %v420
        %v850 = vpop.f32.mrf.mxu0
        %v851 = vadd.f32 %v837, %v850
        %v852 = vpop.f32.mrf.mxu0
        %v853 = vadd.f32 %v839, %v852
        %854 = vdwg.mxu0
        %v855 = vld [vmem:[%s4] sm:$0xff]
        %v856 = vld [vmem:[%s4 + $0x8] sm:$0xff]
        %v857 = vld [vmem:[%s4 + $0x10] sm:$0xff]
        %v858 = vld [vmem:[%s4 + $0x18] sm:$0xff]
        %v859 = vld [vmem:[%s4 + $0x20] sm:$0xff]
        %v860 = vld [vmem:[%s4 + $0x28] sm:$0xff]
        %v861 = vld [vmem:[%s4 + $0x30] sm:$0xff]
        %v862 = vld [vmem:[%s4 + $0x38] sm:$0xff]
        %v863 = vld [vmem:[%s4 + $0x40] sm:$0xff]
        %v864 = vld [vmem:[%s4 + $0x48] sm:$0xff]
        %v865 = vld [vmem:[%s4 + $0x50] sm:$0xff]
        %v866 = vld [vmem:[%s4 + $0x58] sm:$0xff]
        %v867 = vld [vmem:[%s4 + $0x60] sm:$0xff]
        %v868 = vld [vmem:[%s4 + $0x68] sm:$0xff]
        %v869 = vld [vmem:[%s4 + $0x70] sm:$0xff]
        %v870 = vld [vmem:[%s4 + $0x78] sm:$0xff]
        %v871 = vld [vmem:[%s4 + $0x80] sm:$0xff]
        %v872 = vld [vmem:[%s4 + $0x88] sm:$0xff]
        %v873 = vld [vmem:[%s4 + $0x90] sm:$0xff]
        %v874 = vld [vmem:[%s4 + $0x98] sm:$0xff]
        %v875 = vld [vmem:[%s4 + $0xa0] sm:$0xff]
        %v876 = vld [vmem:[%s4 + $0xa8] sm:$0xff]
        %v877 = vld [vmem:[%s4 + $0xb0] sm:$0xff]
        %v878 = vld [vmem:[%s4 + $0xb8] sm:$0xff]
        %v879 = vld [vmem:[%s4 + $0xc0] sm:$0xff]
        %v880 = vld [vmem:[%s4 + $0xc8] sm:$0xff]
        %v881 = vld [vmem:[%s4 + $0xd0] sm:$0xff]
        %v882 = vld [vmem:[%s4 + $0xd8] sm:$0xff]
        %v883 = vld [vmem:[%s4 + $0xe0] sm:$0xff]
        %v884 = vld [vmem:[%s4 + $0xe8] sm:$0xff]
        %v885 = vld [vmem:[%s4 + $0xf0] sm:$0xff]
        %v886 = vld [vmem:[%s4 + $0xf8] sm:$0xff]
        %v887 = vld [vmem:[%s4 + $0x100] sm:$0xff]
        %v888 = vld [vmem:[%s4 + $0x108] sm:$0xff]
        %v889 = vld [vmem:[%s4 + $0x110] sm:$0xff]
        %v890 = vld [vmem:[%s4 + $0x118] sm:$0xff]
        %v891 = vld [vmem:[%s4 + $0x120] sm:$0xff]
        %v892 = vld [vmem:[%s4 + $0x128] sm:$0xff]
        %v893 = vld [vmem:[%s4 + $0x130] sm:$0xff]
        %v894 = vld [vmem:[%s4 + $0x138] sm:$0xff]
        %v895 = vld [vmem:[%s4 + $0x140] sm:$0xff]
        %v896 = vld [vmem:[%s4 + $0x148] sm:$0xff]
        %v897 = vld [vmem:[%s4 + $0x150] sm:$0xff]
        %v898 = vld [vmem:[%s4 + $0x158] sm:$0xff]
        %v899 = vld [vmem:[%s4 + $0x160] sm:$0xff]
        %v900 = vld [vmem:[%s4 + $0x168] sm:$0xff]
        %v901 = vld [vmem:[%s4 + $0x170] sm:$0xff]
        %v902 = vld [vmem:[%s4 + $0x178] sm:$0xff]
        %v903 = vld [vmem:[%s4 + $0x180] sm:$0xff]
        %v904 = vld [vmem:[%s4 + $0x188] sm:$0xff]
        %v905 = vld [vmem:[%s4 + $0x190] sm:$0xff]
        %v906 = vld [vmem:[%s4 + $0x198] sm:$0xff]
        %v907 = vld [vmem:[%s4 + $0x1a0] sm:$0xff]
        %v908 = vld [vmem:[%s4 + $0x1a8] sm:$0xff]
        %v909 = vld [vmem:[%s4 + $0x1b0] sm:$0xff]
        %v910 = vld [vmem:[%s4 + $0x1b8] sm:$0xff]
        %v911 = vld [vmem:[%s4 + $0x1c0] sm:$0xff]
        %v912 = vld [vmem:[%s4 + $0x1c8] sm:$0xff]
        %v913 = vld [vmem:[%s4 + $0x1d0] sm:$0xff]
        %v914 = vld [vmem:[%s4 + $0x1d8] sm:$0xff]
        %v915 = vld [vmem:[%s4 + $0x1e0] sm:$0xff]
        %v916 = vld [vmem:[%s4 + $0x1e8] sm:$0xff]
        %v917 = vld [vmem:[%s4 + $0x1f0] sm:$0xff]
        %v918 = vld [vmem:[%s4 + $0x1f8] sm:$0xff]
        %919 = vmatpush.msra.mxu0 %v870
        %920 = vmatpush.msra.mxu0 %v869
        %921 = vmatpush.msra.mxu0 %v868
        %922 = vmatpush.msra.mxu0 %v867
        %923 = vmatpush.msra.mxu0 %v866
        %924 = vmatpush.msra.mxu0 %v865
        %925 = vmatpush.msra.mxu0 %v864
        %926 = vmatpush.msra.mxu0 %v863
        %927 = vmatpush.msra.mxu0 %v862
        %928 = vmatpush.msra.mxu0 %v861
        %929 = vmatpush.msra.mxu0 %v860
        %930 = vmatpush.msra.mxu0 %v859
        %931 = vmatpush.msra.mxu0 %v858
        %932 = vmatpush.msra.mxu0 %v857
        %933 = vmatpush.msra.mxu0 %v856
        %934 = vmatpush.msra.mxu0 %v855
        %935 = vmatmul.f32.gmra.mxu0 %v767
        %v936 = vpop.f32.mrf.mxu0
        %v937 = vadd.f32 0.0, %v936
        %938 = vmatmul.f32.gmra.mxu0 %v769
        %v939 = vpop.f32.mrf.mxu0
        %v940 = vadd.f32 0.0, %v939
        %941 = vdwg.mxu0
        %942 = vmatpush.msra.mxu0 %v886
        %943 = vmatpush.msra.mxu0 %v885
        %944 = vmatpush.msra.mxu0 %v884
        %945 = vmatpush.msra.mxu0 %v883
        %946 = vmatpush.msra.mxu0 %v882
        %947 = vmatpush.msra.mxu0 %v881
        %948 = vmatpush.msra.mxu0 %v880
        %949 = vmatpush.msra.mxu0 %v879
        %950 = vmatpush.msra.mxu0 %v878
        %951 = vmatpush.msra.mxu0 %v877
        %952 = vmatpush.msra.mxu0 %v876
        %953 = vmatpush.msra.mxu0 %v875
        %954 = vmatpush.msra.mxu0 %v874
        %955 = vmatpush.msra.mxu0 %v873
        %956 = vmatpush.msra.mxu0 %v872
        %957 = vmatpush.msra.mxu0 %v871
        %958 = vmatmul.f32.gmra.mxu0 %v795
        %v959 = vpop.f32.mrf.mxu0
        %v960 = vadd.f32 %v937, %v959
        %961 = vmatmul.f32.gmra.mxu0 %v797
        %v962 = vpop.f32.mrf.mxu0
        %v963 = vadd.f32 %v940, %v962
        %964 = vdwg.mxu0
        %965 = vmatpush.msra.mxu0 %v902
        %966 = vmatpush.msra.mxu0 %v901
        %967 = vmatpush.msra.mxu0 %v900
        %968 = vmatpush.msra.mxu0 %v899
        %969 = vmatpush.msra.mxu0 %v898
        %970 = vmatpush.msra.mxu0 %v897
        %971 = vmatpush.msra.mxu0 %v896
        %972 = vmatpush.msra.mxu0 %v895
        %973 = vmatpush.msra.mxu0 %v894
        %974 = vmatpush.msra.mxu0 %v893
        %975 = vmatpush.msra.mxu0 %v892
        %976 = vmatpush.msra.mxu0 %v891
        %977 = vmatpush.msra.mxu0 %v890
        %978 = vmatpush.msra.mxu0 %v889
        %979 = vmatpush.msra.mxu0 %v888
        %980 = vmatpush.msra.mxu0 %v887
        %981 = vmatmul.f32.gmra.mxu0 %v823
        %v982 = vpop.f32.mrf.mxu0
        %v983 = vadd.f32 %v960, %v982
        %984 = vmatmul.f32.gmra.mxu0 %v825
        %v985 = vpop.f32.mrf.mxu0
        %v986 = vadd.f32 %v963, %v985
        %987 = vdwg.mxu0
        %988 = vmatpush.msra.mxu0 %v918
        %989 = vmatpush.msra.mxu0 %v917
        %990 = vmatpush.msra.mxu0 %v916
        %991 = vmatpush.msra.mxu0 %v915
        %992 = vmatpush.msra.mxu0 %v914
        %993 = vmatpush.msra.mxu0 %v913
        %994 = vmatpush.msra.mxu0 %v912
        %995 = vmatpush.msra.mxu0 %v911
        %996 = vmatpush.msra.mxu0 %v910
        %997 = vmatpush.msra.mxu0 %v909
        %998 = vmatpush.msra.mxu0 %v908
        %999 = vmatpush.msra.mxu0 %v907
        %1000 = vmatpush.msra.mxu0 %v906
        %1001 = vmatpush.msra.mxu0 %v905
        %1002 = vmatpush.msra.mxu0 %v904
        %1003 = vmatpush.msra.mxu0 %v903
        %1004 = vmatmul.f32.gmra.mxu0 %v851
        %v1005 = vpop.f32.mrf.mxu0
        %v1006 = vadd.f32 %v983, %v1005
        %1007 = vmatmul.f32.gmra.mxu0 %v853
        %v1008 = vpop.f32.mrf.mxu0
        %v1009 = vadd.f32 %v986, %v1008
        %1010 = vdwg.mxu0
        %vm1011 = vcmask 15360
        %1012 = vst.msk [vmem:[%s329] sm:$0xff] %vm1011, %v1006
        %1013 = vst.msk [vmem:[%s329 + $0x8] sm:$0xff] %vm1011, %v1009
        %v1014 = vld [vmem:[%s3] sm:$0xf]
        %v1016 = vperm.slane %v1014, 0
        %v1017 = vperm.slane %v1014, 1
        %v1018 = vperm.slane %v1014, 2
        %v1019 = vperm.slane %v1014, 3
        %v1024 = vmul.f32 %v767, %v1016
        %v1025 = vmul.f32 %v795, %v1017
        %v1026 = vmul.f32 %v823, %v1018
        %v1027 = vmul.f32 %v851, %v1019
        %v1028 = vmul.f32 %v769, %v1016
        %v1029 = vmul.f32 %v797, %v1017
        %v1030 = vmul.f32 %v825, %v1018
        %v1031 = vmul.f32 %v853, %v1019
        %v1032 = vld [vmem:[%s5] sm:$0xff]
        %v1033 = vld [vmem:[%s5 + $0x8] sm:$0xff]
        %v1034 = vld [vmem:[%s5 + $0x10] sm:$0xff]
        %v1035 = vld [vmem:[%s5 + $0x18] sm:$0xff]
        %v1036 = vld [vmem:[%s5 + $0x20] sm:$0xff]
        %v1037 = vld [vmem:[%s5 + $0x28] sm:$0xff]
        %v1038 = vld [vmem:[%s5 + $0x30] sm:$0xff]
        %v1039 = vld [vmem:[%s5 + $0x38] sm:$0xff]
        %v1040 = vld [vmem:[%s5 + $0x40] sm:$0xff]
        %v1041 = vld [vmem:[%s5 + $0x48] sm:$0xff]
        %v1042 = vld [vmem:[%s5 + $0x50] sm:$0xff]
        %v1043 = vld [vmem:[%s5 + $0x58] sm:$0xff]
        %v1044 = vld [vmem:[%s5 + $0x60] sm:$0xff]
        %v1045 = vld [vmem:[%s5 + $0x68] sm:$0xff]
        %v1046 = vld [vmem:[%s5 + $0x70] sm:$0xff]
        %v1047 = vld [vmem:[%s5 + $0x78] sm:$0xff]
        %v1048 = vld [vmem:[%s5 + $0x80] sm:$0xff]
        %v1049 = vld [vmem:[%s5 + $0x88] sm:$0xff]
        %v1050 = vld [vmem:[%s5 + $0x90] sm:$0xff]
        %v1051 = vld [vmem:[%s5 + $0x98] sm:$0xff]
        %v1052 = vld [vmem:[%s5 + $0xa0] sm:$0xff]
        %v1053 = vld [vmem:[%s5 + $0xa8] sm:$0xff]
        %v1054 = vld [vmem:[%s5 + $0xb0] sm:$0xff]
        %v1055 = vld [vmem:[%s5 + $0xb8] sm:$0xff]
        %v1056 = vld [vmem:[%s5 + $0xc0] sm:$0xff]
        %v1057 = vld [vmem:[%s5 + $0xc8] sm:$0xff]
        %v1058 = vld [vmem:[%s5 + $0xd0] sm:$0xff]
        %v1059 = vld [vmem:[%s5 + $0xd8] sm:$0xff]
        %v1060 = vld [vmem:[%s5 + $0xe0] sm:$0xff]
        %v1061 = vld [vmem:[%s5 + $0xe8] sm:$0xff]
        %v1062 = vld [vmem:[%s5 + $0xf0] sm:$0xff]
        %v1063 = vld [vmem:[%s5 + $0xf8] sm:$0xff]
        %v1064 = vld [vmem:[%s5 + $0x100] sm:$0xff]
        %v1065 = vld [vmem:[%s5 + $0x108] sm:$0xff]
        %v1066 = vld [vmem:[%s5 + $0x110] sm:$0xff]
        %v1067 = vld [vmem:[%s5 + $0x118] sm:$0xff]
        %v1068 = vld [vmem:[%s5 + $0x120] sm:$0xff]
        %v1069 = vld [vmem:[%s5 + $0x128] sm:$0xff]
        %v1070 = vld [vmem:[%s5 + $0x130] sm:$0xff]
        %v1071 = vld [vmem:[%s5 + $0x138] sm:$0xff]
        %v1072 = vld [vmem:[%s5 + $0x140] sm:$0xff]
        %v1073 = vld [vmem:[%s5 + $0x148] sm:$0xff]
        %v1074 = vld [vmem:[%s5 + $0x150] sm:$0xff]
        %v1075 = vld [vmem:[%s5 + $0x158] sm:$0xff]
        %v1076 = vld [vmem:[%s5 + $0x160] sm:$0xff]
        %v1077 = vld [vmem:[%s5 + $0x168] sm:$0xff]
        %v1078 = vld [vmem:[%s5 + $0x170] sm:$0xff]
        %v1079 = vld [vmem:[%s5 + $0x178] sm:$0xff]
        %v1080 = vld [vmem:[%s5 + $0x180] sm:$0xff]
        %v1081 = vld [vmem:[%s5 + $0x188] sm:$0xff]
        %v1082 = vld [vmem:[%s5 + $0x190] sm:$0xff]
        %v1083 = vld [vmem:[%s5 + $0x198] sm:$0xff]
        %v1084 = vld [vmem:[%s5 + $0x1a0] sm:$0xff]
        %v1085 = vld [vmem:[%s5 + $0x1a8] sm:$0xff]
        %v1086 = vld [vmem:[%s5 + $0x1b0] sm:$0xff]
        %v1087 = vld [vmem:[%s5 + $0x1b8] sm:$0xff]
        %v1088 = vld [vmem:[%s5 + $0x1c0] sm:$0xff]
        %v1089 = vld [vmem:[%s5 + $0x1c8] sm:$0xff]
        %v1090 = vld [vmem:[%s5 + $0x1d0] sm:$0xff]
        %v1091 = vld [vmem:[%s5 + $0x1d8] sm:$0xff]
        %v1092 = vld [vmem:[%s5 + $0x1e0] sm:$0xff]
        %v1093 = vld [vmem:[%s5 + $0x1e8] sm:$0xff]
        %v1094 = vld [vmem:[%s5 + $0x1f0] sm:$0xff]
        %v1095 = vld [vmem:[%s5 + $0x1f8] sm:$0xff]
        %1096 = vmatpush.msra.mxu0 %v1047
        %1097 = vmatpush.msra.mxu0 %v1046
        %1098 = vmatpush.msra.mxu0 %v1045
        %1099 = vmatpush.msra.mxu0 %v1044
        %1100 = vmatpush.msra.mxu0 %v1043
        %1101 = vmatpush.msra.mxu0 %v1042
        %1102 = vmatpush.msra.mxu0 %v1041
        %1103 = vmatpush.msra.mxu0 %v1040
        %1104 = vmatpush.msra.mxu0 %v1039
        %1105 = vmatpush.msra.mxu0 %v1038
        %1106 = vmatpush.msra.mxu0 %v1037
        %1107 = vmatpush.msra.mxu0 %v1036
        %1108 = vmatpush.msra.mxu0 %v1035
        %1109 = vmatpush.msra.mxu0 %v1034
        %1110 = vmatpush.msra.mxu0 %v1033
        %1111 = vmatpush.msra.mxu0 %v1032
        %1112 = vmatmul.f32.gmra.mxu0 %v1024
        %v1113 = vpop.f32.mrf.mxu0
        %v1114 = vadd.f32 0.0, %v1113
        %1115 = vmatmul.f32.gmra.mxu0 %v1028
        %v1116 = vpop.f32.mrf.mxu0
        %v1117 = vadd.f32 0.0, %v1116
        %1118 = vdwg.mxu0
        %1119 = vmatpush.msra.mxu0 %v1063
        %1120 = vmatpush.msra.mxu0 %v1062
        %1121 = vmatpush.msra.mxu0 %v1061
        %1122 = vmatpush.msra.mxu0 %v1060
        %1123 = vmatpush.msra.mxu0 %v1059
        %1124 = vmatpush.msra.mxu0 %v1058
        %1125 = vmatpush.msra.mxu0 %v1057
        %1126 = vmatpush.msra.mxu0 %v1056
        %1127 = vmatpush.msra.mxu0 %v1055
        %1128 = vmatpush.msra.mxu0 %v1054
        %1129 = vmatpush.msra.mxu0 %v1053
        %1130 = vmatpush.msra.mxu0 %v1052
        %1131 = vmatpush.msra.mxu0 %v1051
        %1132 = vmatpush.msra.mxu0 %v1050
        %1133 = vmatpush.msra.mxu0 %v1049
        %1134 = vmatpush.msra.mxu0 %v1048
        %1135 = vmatmul.f32.gmra.mxu0 %v1025
        %v1136 = vpop.f32.mrf.mxu0
        %v1137 = vadd.f32 %v1114, %v1136
        %1138 = vmatmul.f32.gmra.mxu0 %v1029
        %v1139 = vpop.f32.mrf.mxu0
        %v1140 = vadd.f32 %v1117, %v1139
        %1141 = vdwg.mxu0
        %1142 = vmatpush.msra.mxu0 %v1079
        %1143 = vmatpush.msra.mxu0 %v1078
        %1144 = vmatpush.msra.mxu0 %v1077
        %1145 = vmatpush.msra.mxu0 %v1076
        %1146 = vmatpush.msra.mxu0 %v1075
        %1147 = vmatpush.msra.mxu0 %v1074
        %1148 = vmatpush.msra.mxu0 %v1073
        %1149 = vmatpush.msra.mxu0 %v1072
        %1150 = vmatpush.msra.mxu0 %v1071
        %1151 = vmatpush.msra.mxu0 %v1070
        %1152 = vmatpush.msra.mxu0 %v1069
        %1153 = vmatpush.msra.mxu0 %v1068
        %1154 = vmatpush.msra.mxu0 %v1067
        %1155 = vmatpush.msra.mxu0 %v1066
        %1156 = vmatpush.msra.mxu0 %v1065
        %1157 = vmatpush.msra.mxu0 %v1064
        %1158 = vmatmul.f32.gmra.mxu0 %v1026
        %v1159 = vpop.f32.mrf.mxu0
        %v1160 = vadd.f32 %v1137, %v1159
        %1161 = vmatmul.f32.gmra.mxu0 %v1030
        %v1162 = vpop.f32.mrf.mxu0
        %v1163 = vadd.f32 %v1140, %v1162
        %1164 = vdwg.mxu0
        %1165 = vmatpush.msra.mxu0 %v1095
        %1166 = vmatpush.msra.mxu0 %v1094
        %1167 = vmatpush.msra.mxu0 %v1093
        %1168 = vmatpush.msra.mxu0 %v1092
        %1169 = vmatpush.msra.mxu0 %v1091
        %1170 = vmatpush.msra.mxu0 %v1090
        %1171 = vmatpush.msra.mxu0 %v1089
        %1172 = vmatpush.msra.mxu0 %v1088
        %1173 = vmatpush.msra.mxu0 %v1087
        %1174 = vmatpush.msra.mxu0 %v1086
        %1175 = vmatpush.msra.mxu0 %v1085
        %1176 = vmatpush.msra.mxu0 %v1084
        %1177 = vmatpush.msra.mxu0 %v1083
        %1178 = vmatpush.msra.mxu0 %v1082
        %1179 = vmatpush.msra.mxu0 %v1081
        %1180 = vmatpush.msra.mxu0 %v1080
        %1181 = vmatmul.f32.gmra.mxu0 %v1027
        %v1182 = vpop.f32.mrf.mxu0
        %v1183 = vadd.f32 %v1160, %v1182
        %1184 = vmatmul.f32.gmra.mxu0 %v1031
        %v1185 = vpop.f32.mrf.mxu0
        %v1186 = vadd.f32 %v1163, %v1185
        %1187 = vdwg.mxu0
        %1188 = vst.msk [vmem:[%s335] sm:$0xff] %vm1011, %v1183
        %1189 = vst.msk [vmem:[%s335 + $0x8] sm:$0xff] %vm1011, %v1186
        %1190 = vst [vmem:[%s302] sm:$0xff] %v1024
        %1191 = vst [vmem:[%s302 + $0x8] sm:$0xff] %v1025
        %1192 = vst [vmem:[%s302 + $0x10] sm:$0xff] %v1026
        %1193 = vst [vmem:[%s302 + $0x18] sm:$0xff] %v1027
        %1194 = vst [vmem:[%s302 + $0x20] sm:$0xff] %v1028
        %1195 = vst [vmem:[%s302 + $0x28] sm:$0xff] %v1029
        %1196 = vst [vmem:[%s302 + $0x30] sm:$0xff] %v1030
        %1197 = vst [vmem:[%s302 + $0x38] sm:$0xff] %v1031
        %s1198 = sand.u32 %s162, 1
        %s1199 = scalar_lea.sflag [#allocation3], %s1198
        %s1200 = sand.u32 %s162, 1
        %s1201 = smul.addr %s1200, 64
        %s1202 = scalar_lea.vmem [#allocation2], %s1201
        %s1203 = smul.u32 2, %s23
        %p1204 = scmp.lt.s32.totalorder %s1203, 7
        %s1205 = scalar_select %p1204, %s1203, 7
        %s1206 = smul.addr %s1205, 8
        %s1207 = scalar_lea.vmem %s7, %s1206
        %s1208 = smul.u32 2, %s23
        %p1209 = scmp.lt.s32.totalorder %s1208, 7
        %s1210 = scalar_select %p1209, %s1208, 7
        %s1211 = smul.addr %s1210, 8
        %s1212 = scalar_lea.vmem %s8, %s1211
        // Predicated region
        $region45: #{tpu_custom_call.1} parent=43 // pred_check
          %p1213 = pneg %p172
        $region46: #{tpu_custom_call.1} parent=43 // pred_check_branch
          %1215 = sbr.rel (%p1213) target = $region48
        $region47: #{tpu_custom_call.1} parent=43 // pred_region
          %s1216 = smul.u32 2, %s23
          %1218 = vsyncadd %s1199, 0
          %s1219 = smul.addr %s1216, 4
          %s1220 = smul.addr %s1219, 8
          %s1221 = scalar_lea.hbm %s6, %s1220
          %s1222 = sshll.u32 %s1202, 4
          %s1223 = int_to_ptr.vmem [resolvable:$true] %s1222
          %s1224 = sshll.u32 %s1221, 4
          %s1225 = int_to_ptr.hbm [resolvable:$true] %s1224
          %1230 = dma.vmem_to_hbm [thread:$0]  %s1223, 1024, %s1225, %s1199, 512, 512, 32
        $region48: #{tpu_custom_call.1} parent=43 // pred_fallthru
          _
        // Predicated region
        $region49: #{tpu_custom_call.1} parent=43 // pred_check
          %p1231 = pneg %p198
        $region50: #{tpu_custom_call.1} parent=43 // pred_check_branch
          %1233 = sbr.rel (%p1231) target = $region52
        $region51: #{tpu_custom_call.1} parent=43 // pred_region
          %s1234 = smul.u32 2, %s23
        $region52: #{tpu_custom_call.1} parent=43 // pred_fallthru
          _
        // Predicated region
        $region53: #{tpu_custom_call.1} parent=43 // pred_check
          %p1235 = pneg %p224
        $region54: #{tpu_custom_call.1} parent=43 // pred_check_branch
          %1237 = sbr.rel (%p1235) target = $region56
        $region55: #{tpu_custom_call.1} parent=43 // pred_region
          %s1238 = smul.u32 2, %s23
        $region56: #{tpu_custom_call.1} parent=43 // pred_fallthru
          _
      $region44: #{tpu_custom_call.1} parent=5 // pred_fallthru
        _
      %p1239 = scmp.le.s32.totalorder 2, %s18
      // Predicated region
      $region57: #{tpu_custom_call.1} parent=5 // pred_check
        %p1240 = pneg %p1239
      $region58: #{tpu_custom_call.1} parent=5 // pred_check_branch
        %1242 = sbr.rel (%p1240) target = $region60
      $region59: #{tpu_custom_call.1} parent=5 // pred_region
        %s1243 = ssub.s32 %s18, 2
        // Predicated region
        $region61: #{tpu_custom_call.1} parent=59 // pred_check
          %p1244 = pneg %p178
        $region62: #{tpu_custom_call.1} parent=59 // pred_check_branch
          %1246 = sbr.rel (%p1244) target = $region64
        $region63: #{tpu_custom_call.1} parent=59 // pred_region
          %s1247 = sand.u32 %s163, 1
          %s1248 = scalar_lea.sflag [#allocation3], %s1247
          %s1249 = sand.u32 %s163, 1
          %s1250 = smul.addr %s1249, 64
          %s1251 = scalar_lea.vmem [#allocation2], %s1250
          %1253 = dma.done %s1248, 1024
        $region64: #{tpu_custom_call.1} parent=59 // pred_fallthru
          _
        // Predicated region
        $region65: #{tpu_custom_call.1} parent=59 // pred_check
          %p1254 = pneg %p204
        $region66: #{tpu_custom_call.1} parent=59 // pred_check_branch
          %1256 = sbr.rel (%p1254) target = $region68
        $region67: #{tpu_custom_call.1} parent=59 // pred_region
          %s1257 = smul.u32 2, %s24
          %p1258 = scmp.lt.s32.totalorder %s1257, 7
          %s1259 = scalar_select %p1258, %s1257, 7
          %s1260 = smul.addr %s1259, 8
          %s1261 = scalar_lea.vmem %s7, %s1260
        $region68: #{tpu_custom_call.1} parent=59 // pred_fallthru
          _
        // Predicated region
        $region69: #{tpu_custom_call.1} parent=59 // pred_check
          %p1262 = pneg %p230
        $region70: #{tpu_custom_call.1} parent=59 // pred_check_branch
          %1264 = sbr.rel (%p1262) target = $region72
        $region71: #{tpu_custom_call.1} parent=59 // pred_region
          %s1265 = smul.u32 2, %s24
          %p1266 = scmp.lt.s32.totalorder %s1265, 7
          %s1267 = scalar_select %p1266, %s1265, 7
          %s1268 = smul.addr %s1267, 8
          %s1269 = scalar_lea.vmem %s8, %s1268
        $region72: #{tpu_custom_call.1} parent=59 // pred_fallthru
          _
      $region60: #{tpu_custom_call.1} parent=5 // pred_fallthru
        _
    $region6: #{tpu_custom_call.1} parent=1 // loop_footer
      %s22 = sadd.s32 1, %s18
    $region7: #{tpu_custom_call.1} parent=1 // loop_footer_branch
      %17 = sbr.rel target = $region3
    $region8: #{tpu_custom_call.1} parent=1 // loop_exit
      _
    %1270 = vsyncpa [#allocation3], 1
    %s1271 = scalar_lea.sflag [#allocation3], 1
    %1272 = vsyncpa %s1271, 1

</llo_original>
